<compile_context>
chip_gen: v6e
topology: v6e:2x2x1
jax: 0.10.0
libtpu: 0.0.40
codegen_flags: <defaults>
</compile_context>

<pallas_src>
import math

import jax
import jax.numpy as jnp
from jax.experimental import pallas as pl
from jax.experimental.pallas import tpu as pltpu

_LANE_WIDTHS = (4096, 2048, 1024, 512, 256, 128)
_MIB = 1024 * 1024


def _sq_err_kernel(logits_ref, y_ref, out_ref):
    # Cast inside the kernel: avoids a separate full-HBM astype pass in the
    # wrapper for mixed-dtype inputs.  VPU has huge slack here (DMA-bound op).
    d = logits_ref[...].astype(out_ref.dtype) - y_ref[...].astype(out_ref.dtype)
    out_ref[...] = d * d


def _vmem_capacity_bytes():
    """Best-effort physical VMEM query; conservative (v7x 64 MiB) fallback."""
    try:
        info = pltpu.get_tpu_info()
        cap = getattr(info, "vmem_capacity_bytes", None)
        if cap:
            return int(cap)
    except Exception:
        pass
    return 64 * _MIB


def _pick_cols(n):
    """Largest lane-dense (multiple-of-128) width dividing n, prefer rows>=8."""
    for cols in _LANE_WIDTHS:
        if n % cols == 0 and n // cols >= 8:
            return cols
    for cols in _LANE_WIDTHS:
        if n % cols == 0:
            return cols
    return None  # caller pads first, so this never triggers after padding


def criterion(logits, y, *, vmem_block_bytes=None):
    """Elementwise (logits - y)**2, matching torch Criterion.forward."""
    assert logits.shape == y.shape, "logits and y must have the same shape"
    orig_shape = logits.shape
    out_dtype = jnp.promote_types(logits.dtype, y.dtype)

    n = math.prod(orig_shape) if orig_shape else 1
    l_flat = logits.reshape(-1)
    y_flat = y.reshape(-1)

    itemsizes = (logits.dtype.itemsize, y.dtype.itemsize,
                 jnp.dtype(out_dtype).itemsize)
    # Packed-sublane multiple: 8 for 4-byte dtypes, 16 for 2-byte, 32 for 1-byte.
    sub = max(8, max(32 // its for its in itemsizes))

    # Lane-dense view; pad (one fused pass) only if no 128-multiple divides n.
    padded_n = n
    if n % 128 != 0:
        unit = sub * 128
        padded_n = ((n + unit - 1) // unit) * unit
        pad = padded_n - n
        l_flat = jnp.pad(l_flat, (0, pad))
        y_flat = jnp.pad(y_flat, (0, pad))
    cols = _pick_cols(padded_n)
    rows = padded_n // cols
    l2d = l_flat.reshape(rows, cols)
    y2d = y_flat.reshape(rows, cols)

    # Generation-aware block budget (measured roofline plateaus well below 4 MiB).
    vmem_cap = _vmem_capacity_bytes()
    if vmem_block_bytes is None:
        vmem_block_bytes = 8 * _MIB if vmem_cap >= 128 * _MIB else 4 * _MIB

    bytes_per_row = max(cols * max(itemsizes), 1)
    cap_rows = max(sub, (vmem_block_bytes // bytes_per_row) // sub * sub)

    if cap_rows >= rows:
        out_bytes = rows * cols * itemsizes[2]
        if vmem_cap <= 64 * _MIB and out_bytes > 4 * _MIB and rows >= 2 * sub:
            # 2-TC chip (v7x): split mid-size single-block arrays so both
            # TensorCores participate in this bandwidth-bound kernel.
            block_rows = (((rows + 1) // 2) + sub - 1) // sub * sub
        else:
            block_rows = rows                       # single full-extent block
    else:
        num_blocks = pl.cdiv(rows, cap_rows)
        if num_blocks % 2 == 1 and num_blocks > 1:  # even count: balanced on 2 TCs
            num_blocks += 1
        block_rows = ((rows + num_blocks - 1) // num_blocks + sub - 1) // sub * sub
        block_rows = max(sub, min(block_rows, cap_rows))

    grid = (pl.cdiv(rows, block_rows),)

    # VMEM limit from the actual footprint: 3 arrays x 2 pipeline buffers + headroom.
    block_bytes = block_rows * cols * sum(itemsizes)
    vmem_limit = 2 * block_bytes + 8 * _MIB
    vmem_limit = int(min(max(vmem_limit, 16 * _MIB), int(vmem_cap * 0.75)))

    out2d = pl.pallas_call(
        _sq_err_kernel,
        out_shape=jax.ShapeDtypeStruct((rows, cols), out_dtype),
        grid_spec=pltpu.PrefetchScalarGridSpec(
            num_scalar_prefetch=0,
            grid=grid,
            in_specs=[
                pl.BlockSpec((block_rows, cols), lambda i: (i, 0)),
                pl.BlockSpec((block_rows, cols), lambda i: (i, 0)),
            ],
            out_specs=pl.BlockSpec((block_rows, cols), lambda i: (i, 0)),
        ),
        compiler_params=pltpu.CompilerParams(
            dimension_semantics=("parallel",),
            vmem_limit_bytes=vmem_limit,
        ),
    )(l2d, y2d)

    out_flat = out2d.reshape(-1)
    if padded_n != n:
        out_flat = out_flat[:n]
    return out_flat.reshape(orig_shape)


if __name__ == "__main__":
    key = jax.random.PRNGKey(0)
    k1, k2, k3, k4, k5, k6 = jax.random.split(key, 6)

    # Primary check: small NCHW shapes feeding an MSE-style loss.
    logits = jax.random.normal(k1, (2, 4, 16, 16), dtype=jnp.float32)
    y = jax.random.normal(k2, (2, 4, 16, 16), dtype=jnp.float32)
    out = jax.block_until_ready(criterion(logits, y))
    ref = (logits - y) ** 2
    assert out.shape == ref.shape and out.dtype == ref.dtype
    assert jnp.allclose(out, ref, atol=1e-6, rtol=1e-6)

    # Multi-block path with ragged final block (tiny block budget).
    a = jax.random.normal(k3, (64, 4, 32, 33), dtype=jnp.float32)
    b = jax.random.normal(k4, (64, 4, 32, 33), dtype=jnp.float32)
    out2 = jax.block_until_ready(criterion(a, b, vmem_block_bytes=64 * 1024))
    ref2 = (a - b) ** 2
    assert jnp.allclose(out2, ref2, atol=1e-6, rtol=1e-6)

    # Non-128-divisible element count -> fused pad + output slice path.
    c = jax.random.normal(k5, (3, 5, 7), dtype=jnp.float32)
    d = jax.random.normal(k6, (3, 5, 7), dtype=jnp.float32)
    out3 = jax.block_until_ready(criterion(c, d))
    ref3 = (c - d) ** 2
    assert out3.shape == ref3.shape
    assert jnp.allclose(out3, ref3, atol=1e-6, rtol=1e-6)

    # Mixed dtypes: in-kernel cast, output in the promoted dtype (f32).
    lm = logits.astype(jnp.bfloat16)
    out4 = jax.block_until_ready(criterion(lm, y))
    ref4 = (lm.astype(jnp.float32) - y) ** 2
    assert out4.dtype == jnp.float32
    assert jnp.allclose(out4, ref4, atol=1e-5, rtol=1e-5)

    print("KERNEL_OK")
</pallas_src>

<mosaic_0001>
module attributes {stable_mosaic.version = 11 : i64} {
  func.func @_sq_err_kernel(%arg0: i32, %arg1: memref<8x256xf32, #tpu.memory_space<vmem>>, %arg2: memref<8x256xf32, #tpu.memory_space<vmem>>, %arg3: memref<8x256xf32, #tpu.memory_space<vmem>>) attributes {dimension_semantics = [#tpu.dimension_semantics<parallel>], iteration_bounds = array<i64: 1>, scalar_prefetch = 0 : i64, scratch_operands = 0 : i64, tpu.core_type = #tpu.core_type<tc>, window_params = [{transform_indices = @transform_0, window_bounds = array<i64: 8, 256>}, {transform_indices = @transform_1, window_bounds = array<i64: 8, 256>}, {transform_indices = @transform_2, window_bounds = array<i64: 8, 256>}]} {
    %c0 = arith.constant 0 : index
    %c0_0 = arith.constant 0 : index
    %0 = vector.load %arg1[%c0, %c0_0] : memref<8x256xf32, #tpu.memory_space<vmem>>, vector<8x256xf32>
    %c0_1 = arith.constant 0 : index
    %c0_2 = arith.constant 0 : index
    %1 = vector.load %arg2[%c0_1, %c0_2] : memref<8x256xf32, #tpu.memory_space<vmem>>, vector<8x256xf32>
    %2 = arith.subf %0, %1 : vector<8x256xf32>
    %3 = arith.mulf %2, %2 : vector<8x256xf32>
    %c0_3 = arith.constant 0 : index
    %c0_4 = arith.constant 0 : index
    %4 = vector.load %arg3[%c0_3, %c0_4] : memref<8x256xf32, #tpu.memory_space<vmem>>, vector<8x256xf32>
    tpu.vector_store %arg3[%c0_3, %c0_4], %3 {strides = array<i32>} : memref<8x256xf32, #tpu.memory_space<vmem>>, vector<8x256xf32>,
    return
  }
  func.func @transform_0(%arg0: i32) -> (i32, i32) {
    %c0_i32 = arith.constant 0 : i32
    %c0_i32_0 = arith.constant 0 : i32
    return %arg0, %c0_i32 : i32, i32
  }
  func.func @transform_1(%arg0: i32) -> (i32, i32) {
    %c0_i32 = arith.constant 0 : i32
    %c0_i32_0 = arith.constant 0 : i32
    return %arg0, %c0_i32 : i32, i32
  }
  func.func @transform_2(%arg0: i32) -> (i32, i32) {
    %c0_i32 = arith.constant 0 : i32
    %c0_i32_0 = arith.constant 0 : i32
    return %arg0, %c0_i32 : i32, i32
  }
}

</mosaic_0001>

<llo_original>
// kernel: tpu_custom_call.1
$region0: #{tpu_custom_call.1}
  #allocation0 [shape = 'u32[]', space=smem, size = 0x4, offset = 0x4, fixed_abs, tag = 'smem constant byte address 0x4 - core index']
  #allocation1 [shape = 'u32[144,128]{1,0:T(1,128)}', space=vmem, size = 0x12000, scoped, tag = 'internal scratch']
  %s0 = inlined_call_operand.hbm [shape: f32[8,256], index: 0, kind: input, shape index: {}]
  %s1 = inlined_call_operand.hbm [shape: f32[8,256], index: 1, kind: input, shape index: {}]
  %s2 = inlined_call_operand.hbm [shape: f32[8,256], index: 2, kind: output, shape index: {}]
  %s3 = sld [smem:[#allocation0]]
  $region26: #{tpu_custom_call.1} parent=0
    _
  %s5 = ssub.s32 1, %s3
  %s6 = scalar_select 0, %s5, %s3
  $region1: #{tpu_custom_call.1} parent=0
    #allocation2 [shape = 'u8[8192]{0}', space=vmem, size = 0x2000, scoped, tag = 'input window, operand 0, single buffered']
    #allocation3 [shape = 's32[1]{0}', space=sflag, size = 0x4, scoped, tag = 'scoped memory for tpu_custom_call.1']
    #allocation4 [shape = 's32[1]{0}', space=sflag, size = 0x4, scoped, tag = 'scoped memory for tpu_custom_call.1']
    #allocation5 [shape = 'u8[8192]{0}', space=vmem, size = 0x2000, scoped, tag = 'input window, operand 1, single buffered']
    #allocation6 [shape = 's32[1]{0}', space=sflag, size = 0x4, scoped, tag = 'scoped memory for tpu_custom_call.1']
    #allocation7 [shape = 'u8[8192]{0}', space=vmem, size = 0x2000, scoped, tag = 'output window, operand 0, single buffered']
    %7 = vsyncpa [#allocation3], 0
    %8 = vsyncpa [#allocation6], 0
    %9 = vsyncpa [#allocation4], 0
    // Predicated region
    $region2: #{tpu_custom_call.1} parent=1 // pred_check
      _
    $region3: #{tpu_custom_call.1} parent=1 // pred_check_branch
      %11 = sbr.rel (0) target = $region5
    $region4: #{tpu_custom_call.1} parent=1 // pred_region
      %s13 = ssub.s32 256, 256
      %14 = vsyncadd [#allocation3], %s13
      %s16 = sshll.u32 [#allocation2], 4
      %s17 = int_to_ptr.vmem [resolvable:$true] %s16
      %19 = dma.hbm_to_vmem [thread:$0]  %s0, 256, %s17, [#allocation3]
    $region5: #{tpu_custom_call.1} parent=1 // pred_fallthru
      _
    // Predicated region
    $region6: #{tpu_custom_call.1} parent=1 // pred_check
      _
    $region7: #{tpu_custom_call.1} parent=1 // pred_check_branch
      %21 = sbr.rel (0) target = $region9
    $region8: #{tpu_custom_call.1} parent=1 // pred_region
      %s23 = ssub.s32 256, 256
      %24 = vsyncadd [#allocation6], %s23
      %s26 = sshll.u32 [#allocation5], 4
      %s27 = int_to_ptr.vmem [resolvable:$true] %s26
      %29 = dma.hbm_to_vmem [thread:$0]  %s1, 256, %s27, [#allocation6]
    $region9: #{tpu_custom_call.1} parent=1 // pred_fallthru
      _
    // Predicated region
    $region10: #{tpu_custom_call.1} parent=1 // pred_check
      _
    $region11: #{tpu_custom_call.1} parent=1 // pred_check_branch
      %31 = sbr.rel (0) target = $region13
    $region12: #{tpu_custom_call.1} parent=1 // pred_region
      %32 = dma.done [#allocation3], 256
    $region13: #{tpu_custom_call.1} parent=1 // pred_fallthru
      _
    // Predicated region
    $region14: #{tpu_custom_call.1} parent=1 // pred_check
      _
    $region15: #{tpu_custom_call.1} parent=1 // pred_check_branch
      %34 = sbr.rel (0) target = $region17
    $region16: #{tpu_custom_call.1} parent=1 // pred_region
      %35 = dma.done [#allocation6], 256
    $region17: #{tpu_custom_call.1} parent=1 // pred_fallthru
      _
    %v36 = vld [vmem:[#allocation2] sm:$0xff]
    %v37 = vld [vmem:[#allocation2 + $0x8] sm:$0xff]
    %v38 = vld [vmem:[#allocation5] sm:$0xff]
    %v39 = vld [vmem:[#allocation5 + $0x8] sm:$0xff]
    %v40 = vsub.f32 %v36, %v38
    %v41 = vsub.f32 %v37, %v39
    %v42 = vmul.f32 %v40, %v40
    %v43 = vmul.f32 %v41, %v41
    %44 = vst [vmem:[#allocation7] sm:$0xff] %v42
    %45 = vst [vmem:[#allocation7 + $0x8] sm:$0xff] %v43
    // Predicated region
    $region18: #{tpu_custom_call.1} parent=1 // pred_check
      _
    $region19: #{tpu_custom_call.1} parent=1 // pred_check_branch
      %47 = sbr.rel (0) target = $region21
    $region20: #{tpu_custom_call.1} parent=1 // pred_region
      %s49 = ssub.s32 256, 256
      %50 = vsyncadd [#allocation4], %s49
      %s52 = sshll.u32 [#allocation7], 4
      %s53 = int_to_ptr.vmem [resolvable:$true] %s52
      %55 = dma.vmem_to_hbm [thread:$0]  %s53, 256, %s2, [#allocation4]
    $region21: #{tpu_custom_call.1} parent=1 // pred_fallthru
      _
    // Predicated region
    $region22: #{tpu_custom_call.1} parent=1 // pred_check
      _
    $region23: #{tpu_custom_call.1} parent=1 // pred_check_branch
      %57 = sbr.rel (0) target = $region25
    $region24: #{tpu_custom_call.1} parent=1 // pred_region
      %58 = dma.done [#allocation4], 256
    $region25: #{tpu_custom_call.1} parent=1 // pred_fallthru
      _
    %59 = vsyncpa [#allocation3], 1
    %60 = vsyncpa [#allocation6], 1
    %61 = vsyncpa [#allocation4], 1

</llo_original>
